<compile_context>
chip_gen: v7x
topology: tpu7x:2x2x1
jax: 0.10.0
libtpu: 0.0.40
codegen_flags: <defaults>
</compile_context>

<pallas_src>
import jax
import jax.numpy as jnp
from jax.experimental import pallas as pl
from jax.experimental.pallas import tpu as pltpu


def _round_up(x, m):
    return ((x + m - 1) // m) * m


# ----------------------------------------------------------------------------
# Kernel: one M-tile of   out = relu(lu @ wl) @ wol + relu(ru @ wr) @ wor
# ----------------------------------------------------------------------------
def _fused_gemm_kernel(lu_ref, ru_ref, wl_ref, wr_ref, wol_ref, wor_ref,
                       out_ref):
    lh = jnp.dot(lu_ref[...], wl_ref[...], preferred_element_type=jnp.float32)
    rh = jnp.dot(ru_ref[...], wr_ref[...], preferred_element_type=jnp.float32)
    lh = jnp.maximum(lh, 0.0).astype(wol_ref.dtype)   # ReLU, back to bf16 for MXU
    rh = jnp.maximum(rh, 0.0).astype(wor_ref.dtype)
    out = (jnp.dot(lh, wol_ref[...], preferred_element_type=jnp.float32)
           + jnp.dot(rh, wor_ref[...], preferred_element_type=jnp.float32))
    out_ref[...] = out.astype(out_ref.dtype)


# ----------------------------------------------------------------------------
# Span-batched forward: the span loop lives in the matmul M dimension.
# ----------------------------------------------------------------------------
def splitting_model_forward_spans(starts, ends, cuts, f, b,
                                  left_type_embs, right_type_embs, params,
                                  span_block_rows=256):
    """Evaluate SplittingModel.forward for many (start, end, cut) spans.

    Returns [num_spans, batch, label_num] float32.
    """
    B, S, H = f.shape
    T = left_type_embs.shape[1]
    N = int(starts.shape[0])
    L = params["label_num"]

    wl = params["wl_mlp_pad"]        # [K_pad, H_pad] bf16
    wr = params["wr_mlp_pad"]        # [K_pad, H_pad] bf16
    wol = params["w_out_left_pad"]   # [H_pad, L_pad] bf16
    wor = params["w_out_right_pad"]  # [H_pad, L_pad] bf16
    K_pad, H_pad = wl.shape
    L_pad = wol.shape[1]
    K_in = 2 * H + T

    starts = starts.astype(jnp.int32)
    ends = ends.astype(jnp.int32)
    cuts = cuts.astype(jnp.int32)
    sm1 = jnp.mod(starts - 1, S)  # start == 0 wraps to S-1 (PyTorch semantics)

    # ---- wrapper-side gather / subtract / pack (only 6*N rows, not all of f/b) ----
    f_cut = jnp.take(f, cuts, axis=1)   # [B, N, H]
    f_sm1 = jnp.take(f, sm1, axis=1)
    f_end = jnp.take(f, ends, axis=1)
    b_cut = jnp.take(b, cuts, axis=1)
    b_sm1 = jnp.take(b, sm1, axis=1)
    b_end = jnp.take(b, ends, axis=1)

    lte = jnp.broadcast_to(left_type_embs[:, None, :], (B, N, T))
    rte = jnp.broadcast_to(right_type_embs[:, None, :], (B, N, T))

    left_u = jnp.concatenate([f_cut - f_sm1, b_sm1 - b_cut, lte], axis=-1)   # [B,N,K_in]
    right_u = jnp.concatenate([f_end - f_cut, b_cut - b_end, rte], axis=-1)  # [B,N,K_in]

    # span-major rows so the kernel output reshapes directly to [N, B, L]
    left_u = jnp.transpose(left_u, (1, 0, 2)).reshape(N * B, K_in)
    right_u = jnp.transpose(right_u, (1, 0, 2)).reshape(N * B, K_in)

    M = N * B
    TM = min(int(span_block_rows), _round_up(M, 8))   # full-sublane M tiles
    M_pad = _round_up(M, TM)

    lu = jnp.zeros((M_pad, K_pad), jnp.bfloat16).at[:M, :K_in].set(
        left_u.astype(jnp.bfloat16))
    ru = jnp.zeros((M_pad, K_pad), jnp.bfloat16).at[:M, :K_in].set(
        right_u.astype(jnp.bfloat16))

    grid = (M_pad // TM,)

    # Explicit VMEM budget: weights (x2 for double-buffering even though their
    # block index never changes) + streamed input/output blocks, with headroom.
    bytes_weights = 2 * 2 * int(wl.size + wr.size + wol.size + wor.size)
    bytes_stream = 2 * (2 * TM * K_pad * 2 + TM * L_pad * 4)
    vmem_limit = int(min(64 * 2**20,
                         max(16 * 2**20, 2 * (bytes_weights + bytes_stream))))

    out_full = pl.pallas_call(
        _fused_gemm_kernel,
        out_shape=jax.ShapeDtypeStruct((M_pad, L_pad), jnp.float32),
        grid=grid,
        in_specs=[
            pl.BlockSpec((TM, K_pad), lambda i: (i, 0)),   # left_u rows
            pl.BlockSpec((TM, K_pad), lambda i: (i, 0)),   # right_u rows
            # constant-index weight specs: stay VMEM-resident across the grid
            pl.BlockSpec((K_pad, H_pad), lambda i: (0, 0)),
            pl.BlockSpec((K_pad, H_pad), lambda i: (0, 0)),
            pl.BlockSpec((H_pad, L_pad), lambda i: (0, 0)),
            pl.BlockSpec((H_pad, L_pad), lambda i: (0, 0)),
        ],
        out_specs=pl.BlockSpec((TM, L_pad), lambda i: (i, 0)),
        compiler_params=pltpu.CompilerParams(
            dimension_semantics=("parallel",),   # M-block axis (v7x megacore)
            vmem_limit_bytes=vmem_limit),
    )(lu, ru, wl, wr, wol, wor)

    return out_full[:M, :L].reshape(N, B, L)


# ----------------------------------------------------------------------------
# Single-span forward (matches SplittingModel.forward): N=1 through the same
# path — no whole-array f/b VMEM residency.
# ----------------------------------------------------------------------------
def splitting_model_forward(start, end, cut, f, b,
                            left_type_embs, right_type_embs, params):
    out = splitting_model_forward_spans(
        jnp.asarray([start], jnp.int32),
        jnp.asarray([end], jnp.int32),
        jnp.asarray([cut], jnp.int32),
        f, b, left_type_embs, right_type_embs, params)
    return out[0]   # [batch, label_num]


# ----------------------------------------------------------------------------
# Parameters: raw f32 weights (PyTorch-equivalent, bias=False Linears) plus
# padded bf16 weights consumed by the fused kernel.
# ----------------------------------------------------------------------------
def init_params(key, hidden_size, label_num=2, type_dim=10):
    H, T, L = hidden_size, type_dim, label_num
    in_dim = 2 * H + T
    k1, k2, k3, k4 = jax.random.split(key, 4)
    scale = 1.0 / jnp.sqrt(jnp.float32(in_dim))

    # nn.Linear(bias=False) stores weight [out, in]; keep the [in, out] transpose.
    wl_t = jax.random.uniform(k1, (in_dim, H), jnp.float32, -scale, scale)
    wr_t = jax.random.uniform(k2, (in_dim, H), jnp.float32, -scale, scale)
    wL = jax.random.normal(k3, (H, L), jnp.float32)
    wR = jax.random.normal(k4, (H, L), jnp.float32)

    # Pad contraction / hidden dims to 128 multiples (full MXU tiles) and the
    # output width to 128 lanes so the kernel store is lane-dense.
    K_pad = _round_up(in_dim, 128)
    H_pad = _round_up(H, 128)
    L_pad = _round_up(L, 128)

    wl_pad = jnp.zeros((K_pad, H_pad), jnp.float32).at[:in_dim, :H].set(wl_t)
    wr_pad = jnp.zeros((K_pad, H_pad), jnp.float32).at[:in_dim, :H].set(wr_t)
    wol_pad = jnp.zeros((H_pad, L_pad), jnp.float32).at[:H, :L].set(wL)
    wor_pad = jnp.zeros((H_pad, L_pad), jnp.float32).at[:H, :L].set(wR)

    return {
        "left_mlp_w_t": wl_t, "right_mlp_w_t": wr_t,
        "weight_left": wL, "weight_right": wR,
        "wl_mlp_pad": wl_pad.astype(jnp.bfloat16),
        "wr_mlp_pad": wr_pad.astype(jnp.bfloat16),
        "w_out_left_pad": wol_pad.astype(jnp.bfloat16),
        "w_out_right_pad": wor_pad.astype(jnp.bfloat16),
        "label_num": L,
    }


# ----------------------------------------------------------------------------
# Pure-JAX reference with the same bf16-input / f32-accumulate numerics as the
# kernel (mirrors the PyTorch forward).
# ----------------------------------------------------------------------------
def _reference_single(start, end, cut, f, b, lte, rte, params):
    bf16 = jnp.bfloat16
    left_u = jnp.concatenate((f[:, cut, :] - f[:, start - 1, :],
                              b[:, start - 1, :] - b[:, cut, :], lte), axis=1)
    right_u = jnp.concatenate((f[:, end, :] - f[:, cut, :],
                               b[:, cut, :] - b[:, end, :], rte), axis=1)
    lh = jnp.maximum(jnp.dot(left_u.astype(bf16),
                             params["left_mlp_w_t"].astype(bf16),
                             preferred_element_type=jnp.float32), 0.0)
    rh = jnp.maximum(jnp.dot(right_u.astype(bf16),
                             params["right_mlp_w_t"].astype(bf16),
                             preferred_element_type=jnp.float32), 0.0)
    return (jnp.dot(lh.astype(bf16), params["weight_left"].astype(bf16),
                    preferred_element_type=jnp.float32)
            + jnp.dot(rh.astype(bf16), params["weight_right"].astype(bf16),
                      preferred_element_type=jnp.float32))


if __name__ == "__main__":
    key = jax.random.PRNGKey(0)
    hidden_size, label_num, type_dim = 32, 2, 10
    batch, seq = 2, 8

    kp, kf, kb, kl, kr = jax.random.split(key, 5)
    params = init_params(kp, hidden_size, label_num, type_dim)

    f = jax.random.normal(kf, (batch, seq, hidden_size), jnp.float32)
    b = jax.random.normal(kb, (batch, seq, hidden_size), jnp.float32)
    left_type_embs = jax.random.normal(kl, (batch, type_dim), jnp.float32)
    right_type_embs = jax.random.normal(kr, (batch, type_dim), jnp.float32)

    # --- single span (matches SplittingModel.forward exactly) ---
    start, end, cut = 2, 6, 4
    out = splitting_model_forward(start, end, cut, f, b,
                                  left_type_embs, right_type_embs, params)
    out = jax.block_until_ready(out)
    ref = _reference_single(start, end, cut, f, b,
                            left_type_embs, right_type_embs, params)
    assert out.shape == (batch, label_num)
    assert jnp.allclose(out, ref, atol=1e-2, rtol=1e-2)

    # --- many spans in one pallas_call (span x batch rows batched into M) ---
    # Includes a start=0 span to exercise the PyTorch-style negative wrap.
    starts = jnp.array([2, 1, 3, 2, 1, 0], jnp.int32)
    ends = jnp.array([6, 7, 7, 5, 4, 3], jnp.int32)
    cuts = jnp.array([4, 3, 5, 3, 2, 1], jnp.int32)
    outs = splitting_model_forward_spans(starts, ends, cuts, f, b,
                                         left_type_embs, right_type_embs,
                                         params)
    outs = jax.block_until_ready(outs)
    refs = jnp.stack([_reference_single(int(s), int(e), int(c), f, b,
                                        left_type_embs, right_type_embs,
                                        params)
                      for s, e, c in zip(starts, ends, cuts)], axis=0)
    assert outs.shape == (starts.shape[0], batch, label_num)
    assert jnp.allclose(outs, refs, atol=1e-2, rtol=1e-2)

    print("KERNEL_OK")
</pallas_src>

<mosaic_0001>
module attributes {stable_mosaic.version = 11 : i64} {
  func.func @_fused_gemm_kernel(%arg0: i32, %arg1: memref<8x128xbf16, #tpu.memory_space<vmem>>, %arg2: memref<8x128xbf16, #tpu.memory_space<vmem>>, %arg3: memref<128x128xbf16, #tpu.memory_space<vmem>>, %arg4: memref<128x128xbf16, #tpu.memory_space<vmem>>, %arg5: memref<128x128xbf16, #tpu.memory_space<vmem>>, %arg6: memref<128x128xbf16, #tpu.memory_space<vmem>>, %arg7: memref<8x128xf32, #tpu.memory_space<vmem>>) attributes {dimension_semantics = [#tpu.dimension_semantics<parallel>], iteration_bounds = array<i64: 1>, scalar_prefetch = 0 : i64, scratch_operands = 0 : i64, tpu.core_type = #tpu.core_type<tc>, window_params = [{transform_indices = @transform_0, window_bounds = array<i64: 8, 128>}, {transform_indices = @transform_1, window_bounds = array<i64: 8, 128>}, {pipeline_mode = #tpu.pipeline_mode<synchronous>, transform_indices = @transform_2, window_bounds = array<i64: 128, 128>}, {pipeline_mode = #tpu.pipeline_mode<synchronous>, transform_indices = @transform_3, window_bounds = array<i64: 128, 128>}, {pipeline_mode = #tpu.pipeline_mode<synchronous>, transform_indices = @transform_4, window_bounds = array<i64: 128, 128>}, {pipeline_mode = #tpu.pipeline_mode<synchronous>, transform_indices = @transform_5, window_bounds = array<i64: 128, 128>}, {transform_indices = @transform_6, window_bounds = array<i64: 8, 128>}]} {
    %c0 = arith.constant 0 : index
    %c0_0 = arith.constant 0 : index
    %0 = vector.load %arg1[%c0, %c0_0] : memref<8x128xbf16, #tpu.memory_space<vmem>>, vector<8x128xbf16>
    %c0_1 = arith.constant 0 : index
    %c0_2 = arith.constant 0 : index
    %1 = vector.load %arg3[%c0_1, %c0_2] : memref<128x128xbf16, #tpu.memory_space<vmem>>, vector<128x128xbf16>
    %cst = arith.constant dense<0.000000e+00> : vector<8x128xf32>
    %2 = tpu.matmul %0, %1, %cst {dimension_numbers = #tpu.dot_dimension_numbers<[1], [0], [0], [1], [0, 0, 1, 1], [], []>} : vector<8x128xbf16>, vector<128x128xbf16>, vector<8x128xf32> -> vector<8x128xf32>
    %c0_3 = arith.constant 0 : index
    %c0_4 = arith.constant 0 : index
    %3 = vector.load %arg2[%c0_3, %c0_4] : memref<8x128xbf16, #tpu.memory_space<vmem>>, vector<8x128xbf16>
    %c0_5 = arith.constant 0 : index
    %c0_6 = arith.constant 0 : index
    %4 = vector.load %arg4[%c0_5, %c0_6] : memref<128x128xbf16, #tpu.memory_space<vmem>>, vector<128x128xbf16>
    %cst_7 = arith.constant dense<0.000000e+00> : vector<8x128xf32>
    %5 = tpu.matmul %3, %4, %cst_7 {dimension_numbers = #tpu.dot_dimension_numbers<[1], [0], [0], [1], [0, 0, 1, 1], [], []>} : vector<8x128xbf16>, vector<128x128xbf16>, vector<8x128xf32> -> vector<8x128xf32>
    %cst_8 = arith.constant 0.000000e+00 : f32
    %6 = vector.broadcast %cst_8 : f32 to vector<8x128xf32>
    %7 = arith.maximumf %2, %6 : vector<8x128xf32>
    %8 = arith.truncf %7 : vector<8x128xf32> to vector<8x128xbf16>
    %cst_9 = arith.constant 0.000000e+00 : f32
    %9 = vector.broadcast %cst_9 : f32 to vector<8x128xf32>
    %10 = arith.maximumf %5, %9 : vector<8x128xf32>
    %11 = arith.truncf %10 : vector<8x128xf32> to vector<8x128xbf16>
    %c0_10 = arith.constant 0 : index
    %c0_11 = arith.constant 0 : index
    %12 = vector.load %arg5[%c0_10, %c0_11] : memref<128x128xbf16, #tpu.memory_space<vmem>>, vector<128x128xbf16>
    %cst_12 = arith.constant dense<0.000000e+00> : vector<8x128xf32>
    %13 = tpu.matmul %8, %12, %cst_12 {dimension_numbers = #tpu.dot_dimension_numbers<[1], [0], [0], [1], [0, 0, 1, 1], [], []>} : vector<8x128xbf16>, vector<128x128xbf16>, vector<8x128xf32> -> vector<8x128xf32>
    %c0_13 = arith.constant 0 : index
    %c0_14 = arith.constant 0 : index
    %14 = vector.load %arg6[%c0_13, %c0_14] : memref<128x128xbf16, #tpu.memory_space<vmem>>, vector<128x128xbf16>
    %cst_15 = arith.constant dense<0.000000e+00> : vector<8x128xf32>
    %15 = tpu.matmul %11, %14, %cst_15 {dimension_numbers = #tpu.dot_dimension_numbers<[1], [0], [0], [1], [0, 0, 1, 1], [], []>} : vector<8x128xbf16>, vector<128x128xbf16>, vector<8x128xf32> -> vector<8x128xf32>
    %16 = arith.addf %13, %15 : vector<8x128xf32>
    %c0_16 = arith.constant 0 : index
    %c0_17 = arith.constant 0 : index
    %17 = vector.load %arg7[%c0_16, %c0_17] : memref<8x128xf32, #tpu.memory_space<vmem>>, vector<8x128xf32>
    tpu.vector_store %arg7[%c0_16, %c0_17], %16 {strides = array<i32>} : memref<8x128xf32, #tpu.memory_space<vmem>>, vector<8x128xf32>,
    return
  }
  func.func @transform_0(%arg0: i32) -> (i32, i32) {
    %c0_i32 = arith.constant 0 : i32
    %c0_i32_0 = arith.constant 0 : i32
    return %arg0, %c0_i32 : i32, i32
  }
  func.func @transform_1(%arg0: i32) -> (i32, i32) {
    %c0_i32 = arith.constant 0 : i32
    %c0_i32_0 = arith.constant 0 : i32
    return %arg0, %c0_i32 : i32, i32
  }
  func.func @transform_2(%arg0: i32) -> (i32, i32) {
    %c0_i32 = arith.constant 0 : i32
    %c0_i32_0 = arith.constant 0 : i32
    %c0_i32_1 = arith.constant 0 : i32
    return %c0_i32, %c0_i32_0 : i32, i32
  }
  func.func @transform_3(%arg0: i32) -> (i32, i32) {
    %c0_i32 = arith.constant 0 : i32
    %c0_i32_0 = arith.constant 0 : i32
    %c0_i32_1 = arith.constant 0 : i32
    return %c0_i32, %c0_i32_0 : i32, i32
  }
  func.func @transform_4(%arg0: i32) -> (i32, i32) {
    %c0_i32 = arith.constant 0 : i32
    %c0_i32_0 = arith.constant 0 : i32
    %c0_i32_1 = arith.constant 0 : i32
    return %c0_i32, %c0_i32_0 : i32, i32
  }
  func.func @transform_5(%arg0: i32) -> (i32, i32) {
    %c0_i32 = arith.constant 0 : i32
    %c0_i32_0 = arith.constant 0 : i32
    %c0_i32_1 = arith.constant 0 : i32
    return %c0_i32, %c0_i32_0 : i32, i32
  }
  func.func @transform_6(%arg0: i32) -> (i32, i32) {
    %c0_i32 = arith.constant 0 : i32
    %c0_i32_0 = arith.constant 0 : i32
    return %arg0, %c0_i32 : i32, i32
  }
}

</mosaic_0001>

<llo_original>
// kernel: tpu_custom_call.1
$region0: #{tpu_custom_call.1}
  #allocation0 [shape = 'u32[]', space=smem, size = 0x4, offset = 0x4, fixed_abs, tag = 'smem constant byte address 0x4 - core index']
  #allocation1 [shape = 'u32[144,128]{1,0:T(1,128)}', space=vmem, size = 0x12000, scoped, tag = 'internal scratch']
  %s0 = inlined_call_operand.hbm [shape: bf16[8,128], index: 0, kind: input, shape index: {}]
  %s1 = inlined_call_operand.hbm [shape: bf16[8,128], index: 1, kind: input, shape index: {}]
  %s2 = inlined_call_operand.hbm [shape: bf16[128,128], index: 2, kind: input, shape index: {}]
  %s3 = inlined_call_operand.hbm [shape: bf16[128,128], index: 3, kind: input, shape index: {}]
  %s4 = inlined_call_operand.hbm [shape: bf16[128,128], index: 4, kind: input, shape index: {}]
  %s5 = inlined_call_operand.hbm [shape: bf16[128,128], index: 5, kind: input, shape index: {}]
  %s6 = inlined_call_operand.hbm [shape: f32[8,128], index: 6, kind: output, shape index: {}]
  %s7 = sld [smem:[#allocation0]]
  $region58: #{tpu_custom_call.1} parent=0
    _
  %s9 = ssub.s32 1, %s7
  %s10 = scalar_select 0, %s9, %s7
  $region1: #{tpu_custom_call.1} parent=0
    #allocation2 [shape = 'u8[2048]{0}', space=vmem, size = 0x800, scoped, tag = 'input window, operand 0, single buffered']
    #allocation3 [shape = 's32[1]{0}', space=sflag, size = 0x4, scoped, tag = 'scoped memory for tpu_custom_call.1']
    #allocation4 [shape = 's32[1]{0}', space=sflag, size = 0x4, scoped, tag = 'scoped memory for tpu_custom_call.1']
    #allocation5 [shape = 'u8[2048]{0}', space=vmem, size = 0x800, scoped, tag = 'input window, operand 1, single buffered']
    #allocation6 [shape = 's32[1]{0}', space=sflag, size = 0x4, scoped, tag = 'scoped memory for tpu_custom_call.1']
    #allocation7 [shape = 'u8[32768]{0}', space=vmem, size = 0x8000, scoped, tag = 'input window, operand 2, single buffered']
    #allocation8 [shape = 'u8[32768]{0}', space=vmem, size = 0x8000, scoped, tag = 'input window, operand 3, single buffered']
    #allocation9 [shape = 's32[1]{0}', space=sflag, size = 0x4, scoped, tag = 'scoped memory for tpu_custom_call.1']
    #allocation10 [shape = 'u8[32768]{0}', space=vmem, size = 0x8000, scoped, tag = 'input window, operand 4, single buffered']
    #allocation11 [shape = 'u8[32768]{0}', space=vmem, size = 0x8000, scoped, tag = 'input window, operand 5, single buffered']
    #allocation12 [shape = 's32[1]{0}', space=sflag, size = 0x4, scoped, tag = 'scoped memory for tpu_custom_call.1']
    #allocation13 [shape = 'u8[4096]{0}', space=vmem, size = 0x1000, scoped, tag = 'output window, operand 0, single buffered']
    %11 = vsyncpa [#allocation3], 0
    %12 = vsyncpa [#allocation6], 0
    %13 = vsyncpa [#allocation9], 0
    %14 = vsyncpa [#allocation12], 0
    %15 = vsyncpa [#allocation4], 0
    // Predicated region
    $region2: #{tpu_custom_call.1} parent=1 // pred_check
      _
    $region3: #{tpu_custom_call.1} parent=1 // pred_check_branch
      %17 = sbr.rel (0) target = $region5
    $region4: #{tpu_custom_call.1} parent=1 // pred_region
      %s19 = ssub.s32 64, 64
      %20 = vsyncadd [#allocation3], %s19
      %s22 = sshll.u32 [#allocation2], 4
      %s23 = int_to_ptr.vmem [resolvable:$true] %s22
      %25 = dma.hbm_to_vmem [thread:$0]  %s0, 64, %s23, [#allocation3]
    $region5: #{tpu_custom_call.1} parent=1 // pred_fallthru
      _
    // Predicated region
    $region6: #{tpu_custom_call.1} parent=1 // pred_check
      _
    $region7: #{tpu_custom_call.1} parent=1 // pred_check_branch
      %27 = sbr.rel (0) target = $region9
    $region8: #{tpu_custom_call.1} parent=1 // pred_region
      %s29 = ssub.s32 64, 64
      %30 = vsyncadd [#allocation6], %s29
      %s32 = sshll.u32 [#allocation5], 4
      %s33 = int_to_ptr.vmem [resolvable:$true] %s32
      %35 = dma.hbm_to_vmem [thread:$0]  %s1, 64, %s33, [#allocation6]
    $region9: #{tpu_custom_call.1} parent=1 // pred_fallthru
      _
    // Predicated region
    $region10: #{tpu_custom_call.1} parent=1 // pred_check
      _
    $region11: #{tpu_custom_call.1} parent=1 // pred_check_branch
      %37 = sbr.rel (0) target = $region13
    $region12: #{tpu_custom_call.1} parent=1 // pred_region
      %s39 = ssub.s32 1024, 1024
      %40 = vsyncadd [#allocation6], %s39
      %s41 = sshll.u32 [#allocation7], 4
      %s42 = int_to_ptr.vmem [resolvable:$true] %s41
      %47 = dma.hbm_to_vmem [thread:$0]  %s2, 1024, %s42, [#allocation6], 64, 64, 4
    $region13: #{tpu_custom_call.1} parent=1 // pred_fallthru
      _
    // Predicated region
    $region14: #{tpu_custom_call.1} parent=1 // pred_check
      _
    $region15: #{tpu_custom_call.1} parent=1 // pred_check_branch
      %49 = sbr.rel (0) target = $region17
    $region16: #{tpu_custom_call.1} parent=1 // pred_region
      %s51 = ssub.s32 1024, 1024
      %52 = vsyncadd [#allocation9], %s51
      %s53 = sshll.u32 [#allocation8], 4
      %s54 = int_to_ptr.vmem [resolvable:$true] %s53
      %59 = dma.hbm_to_vmem [thread:$0]  %s3, 1024, %s54, [#allocation9], 64, 64, 4
    $region17: #{tpu_custom_call.1} parent=1 // pred_fallthru
      _
    // Predicated region
    $region18: #{tpu_custom_call.1} parent=1 // pred_check
      _
    $region19: #{tpu_custom_call.1} parent=1 // pred_check_branch
      %61 = sbr.rel (0) target = $region21
    $region20: #{tpu_custom_call.1} parent=1 // pred_region
      %s63 = ssub.s32 1024, 1024
      %64 = vsyncadd [#allocation9], %s63
      %s65 = sshll.u32 [#allocation10], 4
      %s66 = int_to_ptr.vmem [resolvable:$true] %s65
      %71 = dma.hbm_to_vmem [thread:$0]  %s4, 1024, %s66, [#allocation9], 64, 64, 4
    $region21: #{tpu_custom_call.1} parent=1 // pred_fallthru
      _
    // Predicated region
    $region22: #{tpu_custom_call.1} parent=1 // pred_check
      _
    $region23: #{tpu_custom_call.1} parent=1 // pred_check_branch
      %73 = sbr.rel (0) target = $region25
    $region24: #{tpu_custom_call.1} parent=1 // pred_region
      %s75 = ssub.s32 1024, 1024
      %76 = vsyncadd [#allocation12], %s75
      %s77 = sshll.u32 [#allocation11], 4
      %s78 = int_to_ptr.vmem [resolvable:$true] %s77
      %83 = dma.hbm_to_vmem [thread:$0]  %s5, 1024, %s78, [#allocation12], 64, 64, 4
    $region25: #{tpu_custom_call.1} parent=1 // pred_fallthru
      _
    // Predicated region
    $region26: #{tpu_custom_call.1} parent=1 // pred_check
      _
    $region27: #{tpu_custom_call.1} parent=1 // pred_check_branch
      %85 = sbr.rel (0) target = $region29
    $region28: #{tpu_custom_call.1} parent=1 // pred_region
      %86 = dma.done [#allocation3], 64
    $region29: #{tpu_custom_call.1} parent=1 // pred_fallthru
      _
    // Predicated region
    $region30: #{tpu_custom_call.1} parent=1 // pred_check
      _
    $region31: #{tpu_custom_call.1} parent=1 // pred_check_branch
      %88 = sbr.rel (0) target = $region33
    $region32: #{tpu_custom_call.1} parent=1 // pred_region
      %89 = dma.done [#allocation6], 64
    $region33: #{tpu_custom_call.1} parent=1 // pred_fallthru
      _
    // Predicated region
    $region34: #{tpu_custom_call.1} parent=1 // pred_check
      _
    $region35: #{tpu_custom_call.1} parent=1 // pred_check_branch
      %91 = sbr.rel (0) target = $region37
    $region36: #{tpu_custom_call.1} parent=1 // pred_region
      %92 = dma.done [#allocation6], 1024
    $region37: #{tpu_custom_call.1} parent=1 // pred_fallthru
      _
    // Predicated region
    $region38: #{tpu_custom_call.1} parent=1 // pred_check
      _
    $region39: #{tpu_custom_call.1} parent=1 // pred_check_branch
      %94 = sbr.rel (0) target = $region41
    $region40: #{tpu_custom_call.1} parent=1 // pred_region
      %95 = dma.done [#allocation9], 1024
    $region41: #{tpu_custom_call.1} parent=1 // pred_fallthru
      _
    // Predicated region
    $region42: #{tpu_custom_call.1} parent=1 // pred_check
      _
    $region43: #{tpu_custom_call.1} parent=1 // pred_check_branch
      %97 = sbr.rel (0) target = $region45
    $region44: #{tpu_custom_call.1} parent=1 // pred_region
      %98 = dma.done [#allocation9], 1024
    $region45: #{tpu_custom_call.1} parent=1 // pred_fallthru
      _
    // Predicated region
    $region46: #{tpu_custom_call.1} parent=1 // pred_check
      _
    $region47: #{tpu_custom_call.1} parent=1 // pred_check_branch
      %100 = sbr.rel (0) target = $region49
    $region48: #{tpu_custom_call.1} parent=1 // pred_region
      %101 = dma.done [#allocation12], 1024
    $region49: #{tpu_custom_call.1} parent=1 // pred_fallthru
      _
    %v103 = vld [vmem:[#allocation2] sm:$0xf]
    %v104 = vld [vmem:[#allocation7] sm:$0xf]
    %v105 = vld [vmem:[#allocation7 + $0x4] sm:$0xf]
    %v106 = vld [vmem:[#allocation7 + $0x8] sm:$0xf]
    %v107 = vld [vmem:[#allocation7 + $0xc] sm:$0xf]
    %v108 = vld [vmem:[#allocation7 + $0x10] sm:$0xf]
    %v109 = vld [vmem:[#allocation7 + $0x14] sm:$0xf]
    %v110 = vld [vmem:[#allocation7 + $0x18] sm:$0xf]
    %v111 = vld [vmem:[#allocation7 + $0x1c] sm:$0xf]
    %v112 = vld [vmem:[#allocation7 + $0x20] sm:$0xf]
    %v113 = vld [vmem:[#allocation7 + $0x24] sm:$0xf]
    %v114 = vld [vmem:[#allocation7 + $0x28] sm:$0xf]
    %v115 = vld [vmem:[#allocation7 + $0x2c] sm:$0xf]
    %v116 = vld [vmem:[#allocation7 + $0x30] sm:$0xf]
    %v117 = vld [vmem:[#allocation7 + $0x34] sm:$0xf]
    %v118 = vld [vmem:[#allocation7 + $0x38] sm:$0xf]
    %v119 = vld [vmem:[#allocation7 + $0x3c] sm:$0xf]
    %v136 = vunpack.c.l.b16 %v104
    %v137 = vunpack.c.l.b16 %v105
    %v138 = vunpack.c.l.b16 %v106
    %v139 = vunpack.c.l.b16 %v107
    %v140 = vunpack.c.l.b16 %v108
    %v141 = vunpack.c.l.b16 %v109
    %v142 = vunpack.c.l.b16 %v110
    %v143 = vunpack.c.l.b16 %v111
    %v144 = vunpack.c.l.b16 %v112
    %v145 = vunpack.c.l.b16 %v113
    %v146 = vunpack.c.l.b16 %v114
    %v147 = vunpack.c.l.b16 %v115
    %v148 = vunpack.c.l.b16 %v116
    %v149 = vunpack.c.l.b16 %v117
    %v150 = vunpack.c.l.b16 %v118
    %v151 = vunpack.c.l.b16 %v119
    %v152 = vpack.c.b16 %v137, %v136
    %v153 = vpack.c.b16 %v139, %v138
    %v154 = vpack.c.b16 %v141, %v140
    %v155 = vpack.c.b16 %v143, %v142
    %v156 = vpack.c.b16 %v145, %v144
    %v157 = vpack.c.b16 %v147, %v146
    %v158 = vpack.c.b16 %v149, %v148
    %v159 = vpack.c.b16 %v151, %v150
    %168 = vmatprep.subr.bf16.mxu0 0
    %169 = vmatpush1.bf16.msra.mxu0 %v152
    %170 = vmatprep.subr.bf16.mxu0 0
    %171 = vmatpush1.bf16.msra.mxu0 %v153
    %172 = vmatprep.subr.bf16.mxu0 0
    %173 = vmatpush1.bf16.msra.mxu0 %v154
    %174 = vmatprep.subr.bf16.mxu0 0
    %175 = vmatpush1.bf16.msra.mxu0 %v155
    %176 = vmatprep.subr.bf16.mxu0 0
    %177 = vmatpush1.bf16.msra.mxu0 %v156
    %178 = vmatprep.subr.bf16.mxu0 0
    %179 = vmatpush1.bf16.msra.mxu0 %v157
    %180 = vmatprep.subr.bf16.mxu0 0
    %181 = vmatpush1.bf16.msra.mxu0 %v158
    %182 = vmatprep.subr.bf16.mxu0 0
    %183 = vmatpush1.bf16.msra.mxu0 %v159
    %184 = vmatprep.subr.bf16.mxu0 0
    %185 = vmatpush1.bf16.msra.mxu0 0
    %186 = vmatprep.subr.bf16.mxu0 0
    %187 = vmatpush1.bf16.msra.mxu0 0
    %188 = vmatprep.subr.bf16.mxu0 0
    %189 = vmatpush1.bf16.msra.mxu0 0
    %190 = vmatprep.subr.bf16.mxu0 0
    %191 = vmatpush1.bf16.msra.mxu0 0
    %192 = vmatprep.subr.bf16.mxu0 0
    %193 = vmatpush1.bf16.msra.mxu0 0
    %194 = vmatprep.subr.bf16.mxu0 0
    %195 = vmatpush1.bf16.msra.mxu0 0
    %196 = vmatprep.subr.bf16.mxu0 0
    %197 = vmatpush1.bf16.msra.mxu0 0
    %198 = vmatprep.subr.bf16.mxu0 0
    %199 = vmatpush1.bf16.msra.mxu0 0
    %200 = vmatprep.mubr.bf16.mxu0 0
    %201 = vmatmul.mubr.bf16.gmra.mrb[0].mxu0 %v103
    %v202 = vpop.f32.mrb[0].mxu0
    %v203 = vadd.f32 0.0, %v202
    %v204 = vpop.f32.mrb[0].mxu0
    %v205 = vpop.f32.mrb[0].mxu0
    %v206 = vpop.f32.mrb[0].mxu0
    %207 = vdwg.mxu0
    %v208 = vld [vmem:[#allocation5] sm:$0xf]
    %v209 = vld [vmem:[#allocation8] sm:$0xf]
    %v210 = vld [vmem:[#allocation8 + $0x4] sm:$0xf]
    %v211 = vld [vmem:[#allocation8 + $0x8] sm:$0xf]
    %v212 = vld [vmem:[#allocation8 + $0xc] sm:$0xf]
    %v213 = vld [vmem:[#allocation8 + $0x10] sm:$0xf]
    %v214 = vld [vmem:[#allocation8 + $0x14] sm:$0xf]
    %v215 = vld [vmem:[#allocation8 + $0x18] sm:$0xf]
    %v216 = vld [vmem:[#allocation8 + $0x1c] sm:$0xf]
    %v217 = vld [vmem:[#allocation8 + $0x20] sm:$0xf]
    %v218 = vld [vmem:[#allocation8 + $0x24] sm:$0xf]
    %v219 = vld [vmem:[#allocation8 + $0x28] sm:$0xf]
    %v220 = vld [vmem:[#allocation8 + $0x2c] sm:$0xf]
    %v221 = vld [vmem:[#allocation8 + $0x30] sm:$0xf]
    %v222 = vld [vmem:[#allocation8 + $0x34] sm:$0xf]
    %v223 = vld [vmem:[#allocation8 + $0x38] sm:$0xf]
    %v224 = vld [vmem:[#allocation8 + $0x3c] sm:$0xf]
    %v241 = vunpack.c.l.b16 %v209
    %v242 = vunpack.c.l.b16 %v210
    %v243 = vunpack.c.l.b16 %v211
    %v244 = vunpack.c.l.b16 %v212
    %v245 = vunpack.c.l.b16 %v213
    %v246 = vunpack.c.l.b16 %v214
    %v247 = vunpack.c.l.b16 %v215
    %v248 = vunpack.c.l.b16 %v216
    %v249 = vunpack.c.l.b16 %v217
    %v250 = vunpack.c.l.b16 %v218
    %v251 = vunpack.c.l.b16 %v219
    %v252 = vunpack.c.l.b16 %v220
    %v253 = vunpack.c.l.b16 %v221
    %v254 = vunpack.c.l.b16 %v222
    %v255 = vunpack.c.l.b16 %v223
    %v256 = vunpack.c.l.b16 %v224
    %v257 = vpack.c.b16 %v242, %v241
    %v258 = vpack.c.b16 %v244, %v243
    %v259 = vpack.c.b16 %v246, %v245
    %v260 = vpack.c.b16 %v248, %v247
    %v261 = vpack.c.b16 %v250, %v249
    %v262 = vpack.c.b16 %v252, %v251
    %v263 = vpack.c.b16 %v254, %v253
    %v264 = vpack.c.b16 %v256, %v255
    %273 = vmatprep.subr.bf16.mxu0 0
    %274 = vmatpush1.bf16.msra.mxu0 %v257
    %275 = vmatprep.subr.bf16.mxu0 0
    %276 = vmatpush1.bf16.msra.mxu0 %v258
    %277 = vmatprep.subr.bf16.mxu0 0
    %278 = vmatpush1.bf16.msra.mxu0 %v259
    %279 = vmatprep.subr.bf16.mxu0 0
    %280 = vmatpush1.bf16.msra.mxu0 %v260
    %281 = vmatprep.subr.bf16.mxu0 0
    %282 = vmatpush1.bf16.msra.mxu0 %v261
    %283 = vmatprep.subr.bf16.mxu0 0
    %284 = vmatpush1.bf16.msra.mxu0 %v262
    %285 = vmatprep.subr.bf16.mxu0 0
    %286 = vmatpush1.bf16.msra.mxu0 %v263
    %287 = vmatprep.subr.bf16.mxu0 0
    %288 = vmatpush1.bf16.msra.mxu0 %v264
    %289 = vmatprep.subr.bf16.mxu0 0
    %290 = vmatpush1.bf16.msra.mxu0 0
    %291 = vmatprep.subr.bf16.mxu0 0
    %292 = vmatpush1.bf16.msra.mxu0 0
    %293 = vmatprep.subr.bf16.mxu0 0
    %294 = vmatpush1.bf16.msra.mxu0 0
    %295 = vmatprep.subr.bf16.mxu0 0
    %296 = vmatpush1.bf16.msra.mxu0 0
    %297 = vmatprep.subr.bf16.mxu0 0
    %298 = vmatpush1.bf16.msra.mxu0 0
    %299 = vmatprep.subr.bf16.mxu0 0
    %300 = vmatpush1.bf16.msra.mxu0 0
    %301 = vmatprep.subr.bf16.mxu0 0
    %302 = vmatpush1.bf16.msra.mxu0 0
    %303 = vmatprep.subr.bf16.mxu0 0
    %304 = vmatpush1.bf16.msra.mxu0 0
    %305 = vmatprep.mubr.bf16.mxu0 0
    %306 = vmatmul.mubr.bf16.gmra.mrb[0].mxu0 %v208
    %v307 = vpop.f32.mrb[0].mxu0
    %v308 = vadd.f32 0.0, %v307
    %v309 = vpop.f32.mrb[0].mxu0
    %v310 = vpop.f32.mrb[0].mxu0
    %v311 = vpop.f32.mrb[0].mxu0
    %312 = vdwg.mxu0
    %v313 = vmax.f32 %v203, 0.0
    %v314 = vpack.c.bf16 %v313, %v313
    %v315 = vmax.f32 %v308, 0.0
    %v316 = vpack.c.bf16 %v315, %v315
    %v317 = vld [vmem:[#allocation10] sm:$0xf]
    %v318 = vld [vmem:[#allocation10 + $0x4] sm:$0xf]
    %v319 = vld [vmem:[#allocation10 + $0x8] sm:$0xf]
    %v320 = vld [vmem:[#allocation10 + $0xc] sm:$0xf]
    %v321 = vld [vmem:[#allocation10 + $0x10] sm:$0xf]
    %v322 = vld [vmem:[#allocation10 + $0x14] sm:$0xf]
    %v323 = vld [vmem:[#allocation10 + $0x18] sm:$0xf]
    %v324 = vld [vmem:[#allocation10 + $0x1c] sm:$0xf]
    %v325 = vld [vmem:[#allocation10 + $0x20] sm:$0xf]
    %v326 = vld [vmem:[#allocation10 + $0x24] sm:$0xf]
    %v327 = vld [vmem:[#allocation10 + $0x28] sm:$0xf]
    %v328 = vld [vmem:[#allocation10 + $0x2c] sm:$0xf]
    %v329 = vld [vmem:[#allocation10 + $0x30] sm:$0xf]
    %v330 = vld [vmem:[#allocation10 + $0x34] sm:$0xf]
    %v331 = vld [vmem:[#allocation10 + $0x38] sm:$0xf]
    %v332 = vld [vmem:[#allocation10 + $0x3c] sm:$0xf]
    %v333 = vld [vmem:[#allocation11] sm:$0xf]
    %v334 = vld [vmem:[#allocation11 + $0x4] sm:$0xf]
    %v335 = vld [vmem:[#allocation11 + $0x8] sm:$0xf]
    %v336 = vld [vmem:[#allocation11 + $0xc] sm:$0xf]
    %v337 = vld [vmem:[#allocation11 + $0x10] sm:$0xf]
    %v338 = vld [vmem:[#allocation11 + $0x14] sm:$0xf]
    %v339 = vld [vmem:[#allocation11 + $0x18] sm:$0xf]
    %v340 = vld [vmem:[#allocation11 + $0x1c] sm:$0xf]
    %v341 = vld [vmem:[#allocation11 + $0x20] sm:$0xf]
    %v342 = vld [vmem:[#allocation11 + $0x24] sm:$0xf]
    %v343 = vld [vmem:[#allocation11 + $0x28] sm:$0xf]
    %v344 = vld [vmem:[#allocation11 + $0x2c] sm:$0xf]
    %v345 = vld [vmem:[#allocation11 + $0x30] sm:$0xf]
    %v346 = vld [vmem:[#allocation11 + $0x34] sm:$0xf]
    %v347 = vld [vmem:[#allocation11 + $0x38] sm:$0xf]
    %v348 = vld [vmem:[#allocation11 + $0x3c] sm:$0xf]
    %v365 = vunpack.c.l.b16 %v333
    %v366 = vunpack.c.l.b16 %v334
    %v367 = vunpack.c.l.b16 %v335
    %v368 = vunpack.c.l.b16 %v336
    %v369 = vunpack.c.l.b16 %v337
    %v370 = vunpack.c.l.b16 %v338
    %v371 = vunpack.c.l.b16 %v339
    %v372 = vunpack.c.l.b16 %v340
    %v373 = vunpack.c.l.b16 %v341
    %v374 = vunpack.c.l.b16 %v342
    %v375 = vunpack.c.l.b16 %v343
    %v376 = vunpack.c.l.b16 %v344
    %v377 = vunpack.c.l.b16 %v345
    %v378 = vunpack.c.l.b16 %v346
    %v379 = vunpack.c.l.b16 %v347
    %v380 = vunpack.c.l.b16 %v348
    %v381 = vpack.c.b16 %v366, %v365
    %v382 = vpack.c.b16 %v368, %v367
    %v383 = vpack.c.b16 %v370, %v369
    %v384 = vpack.c.b16 %v372, %v371
    %v385 = vpack.c.b16 %v374, %v373
    %v386 = vpack.c.b16 %v376, %v375
    %v387 = vpack.c.b16 %v378, %v377
    %v388 = vpack.c.b16 %v380, %v379
    %397 = vmatprep.subr.bf16.mxu0 0
    %398 = vmatpush1.bf16.msra.mxu0 %v381
    %399 = vmatprep.subr.bf16.mxu0 0
    %400 = vmatpush1.bf16.msra.mxu0 %v382
    %401 = vmatprep.subr.bf16.mxu0 0
    %402 = vmatpush1.bf16.msra.mxu0 %v383
    %403 = vmatprep.subr.bf16.mxu0 0
    %404 = vmatpush1.bf16.msra.mxu0 %v384
    %405 = vmatprep.subr.bf16.mxu0 0
    %406 = vmatpush1.bf16.msra.mxu0 %v385
    %407 = vmatprep.subr.bf16.mxu0 0
    %408 = vmatpush1.bf16.msra.mxu0 %v386
    %409 = vmatprep.subr.bf16.mxu0 0
    %410 = vmatpush1.bf16.msra.mxu0 %v387
    %411 = vmatprep.subr.bf16.mxu0 0
    %412 = vmatpush1.bf16.msra.mxu0 %v388
    %413 = vmatprep.subr.bf16.mxu0 0
    %414 = vmatpush1.bf16.msra.mxu0 0
    %415 = vmatprep.subr.bf16.mxu0 0
    %416 = vmatpush1.bf16.msra.mxu0 0
    %417 = vmatprep.subr.bf16.mxu0 0
    %418 = vmatpush1.bf16.msra.mxu0 0
    %419 = vmatprep.subr.bf16.mxu0 0
    %420 = vmatpush1.bf16.msra.mxu0 0
    %421 = vmatprep.subr.bf16.mxu0 0
    %422 = vmatpush1.bf16.msra.mxu0 0
    %423 = vmatprep.subr.bf16.mxu0 0
    %424 = vmatpush1.bf16.msra.mxu0 0
    %425 = vmatprep.subr.bf16.mxu0 0
    %426 = vmatpush1.bf16.msra.mxu0 0
    %427 = vmatprep.subr.bf16.mxu0 0
    %428 = vmatpush1.bf16.msra.mxu0 0
    %429 = vmatprep.mubr.bf16.mxu0 0
    %430 = vmatmul.mubr.bf16.gmra.mrb[0].mxu0 %v316
    %v431 = vpop.f32.mrb[0].mxu0
    %v432 = vadd.f32 0.0, %v431
    %v433 = vpop.f32.mrb[0].mxu0
    %v434 = vpop.f32.mrb[0].mxu0
    %v435 = vpop.f32.mrb[0].mxu0
    %436 = vdwg.mxu0
    %v453 = vunpack.c.l.b16 %v317
    %v454 = vunpack.c.l.b16 %v318
    %v455 = vunpack.c.l.b16 %v319
    %v456 = vunpack.c.l.b16 %v320
    %v457 = vunpack.c.l.b16 %v321
    %v458 = vunpack.c.l.b16 %v322
    %v459 = vunpack.c.l.b16 %v323
    %v460 = vunpack.c.l.b16 %v324
    %v461 = vunpack.c.l.b16 %v325
    %v462 = vunpack.c.l.b16 %v326
    %v463 = vunpack.c.l.b16 %v327
    %v464 = vunpack.c.l.b16 %v328
    %v465 = vunpack.c.l.b16 %v329
    %v466 = vunpack.c.l.b16 %v330
    %v467 = vunpack.c.l.b16 %v331
    %v468 = vunpack.c.l.b16 %v332
    %v469 = vpack.c.b16 %v454, %v453
    %v470 = vpack.c.b16 %v456, %v455
    %v471 = vpack.c.b16 %v458, %v457
    %v472 = vpack.c.b16 %v460, %v459
    %v473 = vpack.c.b16 %v462, %v461
    %v474 = vpack.c.b16 %v464, %v463
    %v475 = vpack.c.b16 %v466, %v465
    %v476 = vpack.c.b16 %v468, %v467
    %485 = vmatprep.subr.bf16.mxu0 0
    %486 = vmatpush1.bf16.msra.mxu0 %v469
    %487 = vmatprep.subr.bf16.mxu0 0
    %488 = vmatpush1.bf16.msra.mxu0 %v470
    %489 = vmatprep.subr.bf16.mxu0 0
    %490 = vmatpush1.bf16.msra.mxu0 %v471
    %491 = vmatprep.subr.bf16.mxu0 0
    %492 = vmatpush1.bf16.msra.mxu0 %v472
    %493 = vmatprep.subr.bf16.mxu0 0
    %494 = vmatpush1.bf16.msra.mxu0 %v473
    %495 = vmatprep.subr.bf16.mxu0 0
    %496 = vmatpush1.bf16.msra.mxu0 %v474
    %497 = vmatprep.subr.bf16.mxu0 0
    %498 = vmatpush1.bf16.msra.mxu0 %v475
    %499 = vmatprep.subr.bf16.mxu0 0
    %500 = vmatpush1.bf16.msra.mxu0 %v476
    %501 = vmatprep.subr.bf16.mxu0 0
    %502 = vmatpush1.bf16.msra.mxu0 0
    %503 = vmatprep.subr.bf16.mxu0 0
    %504 = vmatpush1.bf16.msra.mxu0 0
    %505 = vmatprep.subr.bf16.mxu0 0
    %506 = vmatpush1.bf16.msra.mxu0 0
    %507 = vmatprep.subr.bf16.mxu0 0
    %508 = vmatpush1.bf16.msra.mxu0 0
    %509 = vmatprep.subr.bf16.mxu0 0
    %510 = vmatpush1.bf16.msra.mxu0 0
    %511 = vmatprep.subr.bf16.mxu0 0
    %512 = vmatpush1.bf16.msra.mxu0 0
    %513 = vmatprep.subr.bf16.mxu0 0
    %514 = vmatpush1.bf16.msra.mxu0 0
    %515 = vmatprep.subr.bf16.mxu0 0
    %516 = vmatpush1.bf16.msra.mxu0 0
    %517 = vmatprep.mubr.bf16.mxu0 0
    %518 = vmatmul.mubr.bf16.gmra.mrb[0].mxu0 %v314
    %v519 = vpop.f32.mrb[0].mxu0
    %v520 = vadd.f32 %v432, %v519
    %v521 = vpop.f32.mrb[0].mxu0
    %v522 = vpop.f32.mrb[0].mxu0
    %v523 = vpop.f32.mrb[0].mxu0
    %524 = vdwg.mxu0
    %525 = vst [vmem:[#allocation13] sm:$0xff] %v520
    // Predicated region
    $region50: #{tpu_custom_call.1} parent=1 // pred_check
      _
    $region51: #{tpu_custom_call.1} parent=1 // pred_check_branch
      %527 = sbr.rel (0) target = $region53
    $region52: #{tpu_custom_call.1} parent=1 // pred_region
      %s529 = ssub.s32 128, 128
      %530 = vsyncadd [#allocation4], %s529
      %s532 = sshll.u32 [#allocation13], 4
      %s533 = int_to_ptr.vmem [resolvable:$true] %s532
      %535 = dma.vmem_to_hbm [thread:$0]  %s533, 128, %s6, [#allocation4]
    $region53: #{tpu_custom_call.1} parent=1 // pred_fallthru
      _
    // Predicated region
    $region54: #{tpu_custom_call.1} parent=1 // pred_check
      _
    $region55: #{tpu_custom_call.1} parent=1 // pred_check_branch
      %537 = sbr.rel (0) target = $region57
    $region56: #{tpu_custom_call.1} parent=1 // pred_region
      %538 = dma.done [#allocation4], 128
    $region57: #{tpu_custom_call.1} parent=1 // pred_fallthru
      _
    %539 = vsyncpa [#allocation3], 1
    %540 = vsyncpa [#allocation6], 1
    %541 = vsyncpa [#allocation9], 1
    %542 = vsyncpa [#allocation12], 1
    %543 = vsyncpa [#allocation4], 1

</llo_original>
